<compile_context>
chip_gen: v6e
topology: v6e:2x2x1
jax: 0.10.0
libtpu: 0.0.40
codegen_flags: <defaults>
</compile_context>

<pallas_src>
import jax
import jax.numpy as jnp
from jax.experimental import pallas as pl
from jax.experimental.pallas import tpu as pltpu

LANE = 128      # lane width: keep feature (last) dims 128-dense
SUBLANE = 8     # f32 sublane granularity for the batch dim


# ---------------------------------------------------------------------------
# helpers
# ---------------------------------------------------------------------------

def _cdiv(a, b):
    return -(-a // b)


def _round_up(n, m):
    return _cdiv(n, m) * m


def _pad_axis(a, axis, target):
    pad = target - a.shape[axis]
    if pad <= 0:
        return a
    widths = [(0, 0)] * a.ndim
    widths[axis] = (0, pad)
    return jnp.pad(a, widths)


def _itemsize(dt):
    return jnp.dtype(dt).itemsize


def _vmem_capacity_bytes():
    try:
        info = pltpu.get_tpu_info()
        cap = int(getattr(info, "vmem_capacity_bytes", 0) or 0)
        if cap > 0:
            return cap
    except Exception:
        pass
    return 64 << 20   # conservative: assume v7x-sized VMEM if the query fails


_VMEM_CAP = _vmem_capacity_bytes()
_BIG_VMEM = _VMEM_CAP >= (96 << 20)            # v5e/v6e (128 MiB) vs v7x (64 MiB)
_DEFAULT_BATCH_TILE = 1024 if _BIG_VMEM else 512
_MIN_GRID = 2 if _BIG_VMEM else 4              # keep >= 4 steps on v7x (2 TCs)


def _batch_tiling(B, max_tile, min_grid):
    """Balanced batch tiles: minimal padding, >= min_grid steps when B allows."""
    max_steps = max(1, _cdiv(B, SUBLANE))
    n_steps = max(_cdiv(B, max_tile), min(min_grid, max_steps))
    TB = _round_up(_cdiv(B, n_steps), SUBLANE)
    Bp = _round_up(B, TB)
    return TB, Bp


def _resident_spec(block_shape):
    """Constant-index (VMEM-resident) operand: fetched once and, when the API
    allows it, single-buffered (halves VMEM vs. default double-buffering)."""
    idx = lambda i: (0, 0)
    buffered = getattr(pl, "Buffered", None)
    if buffered is not None:
        try:
            return pl.BlockSpec(block_shape, idx, pipeline_mode=buffered(1))
        except Exception:
            pass
    return pl.BlockSpec(block_shape, idx)


def _vmem_limit(resident_bytes, streamed_in_bytes, streamed_out_bytes,
                scratch_bytes=0):
    # Double-buffered streamed tiles, worst-case 2x on residents (Buffered(1)
    # halves real usage), in-kernel intermediates, plus headroom; clamp well
    # under the physical VMEM of the current generation.
    need = (2 * resident_bytes
            + 2 * (streamed_in_bytes + streamed_out_bytes)
            + scratch_bytes + (8 << 20))
    return int(max(16 << 20, min(need, int(_VMEM_CAP * 0.75))))


# ---------------------------------------------------------------------------
# one-time weight preparation (hoisted out of the per-call hot path)
# ---------------------------------------------------------------------------

def prepare_vertical_params(w1, b1, w2, b2, compute_dtype=jnp.bfloat16):
    """Pad to 128-lane multiples and cast to the MXU compute dtype ONCE."""
    D, H = w1.shape
    Dp, Hp = _round_up(D, LANE), _round_up(H, LANE)
    return dict(
        D=D, H=H, Dp=Dp, Hp=Hp,
        w1=_pad_axis(_pad_axis(w1, 0, Dp), 1, Hp).astype(compute_dtype),
        b1=_pad_axis(b1.reshape(1, -1), 1, Hp).astype(jnp.float32),
        w2=_pad_axis(_pad_axis(w2, 0, Hp), 1, Dp).astype(compute_dtype),
        b2=_pad_axis(b2.reshape(1, -1), 1, Dp).astype(jnp.float32),
    )


def prepare_horizontal_params(wa, ba, wb, bb, compute_dtype=jnp.bfloat16):
    """Concatenate the two Linear branches into one (D, Ha+Hb) operand ONCE
    so the kernel runs a single lane-dense MXU matmul."""
    D, Ha = wa.shape
    _, Hb = wb.shape
    Dp = _round_up(D, LANE)
    Hap, Hbp = _round_up(Ha, LANE), _round_up(Hb, LANE)
    wcat = jnp.concatenate(
        [_pad_axis(_pad_axis(wa, 0, Dp), 1, Hap),
         _pad_axis(_pad_axis(wb, 0, Dp), 1, Hbp)], axis=1).astype(compute_dtype)
    bcat = jnp.concatenate(
        [_pad_axis(ba.reshape(1, -1), 1, Hap),
         _pad_axis(bb.reshape(1, -1), 1, Hbp)], axis=1).astype(jnp.float32)
    return dict(D=D, Ha=Ha, Hb=Hb, Dp=Dp, Hap=Hap, Hbp=Hbp, w=wcat, b=bcat)


# ---------------------------------------------------------------------------
# kernels (one batch tile per grid step; weights/biases VMEM-resident)
# ---------------------------------------------------------------------------

def _vertical_kernel(x_ref, w1_ref, b1_ref, w2_ref, b2_ref, o_ref):
    # Fused: Linear(D,H) -> ReLU -> Linear(H,D); x cast to bf16 in-kernel.
    x = x_ref[...].astype(w1_ref.dtype)
    h = jnp.dot(x, w1_ref[...], preferred_element_type=jnp.float32)
    h = jnp.maximum(h + b1_ref[...], 0.0)
    y = jnp.dot(h.astype(w2_ref.dtype), w2_ref[...],
                preferred_element_type=jnp.float32)
    o_ref[...] = (y + b2_ref[...]).astype(o_ref.dtype)


def _horizontal_kernel(x_ref, w_ref, b_ref, o_ref):
    # Fused: concat([Linear_a(x), Linear_b(x)], dim=-1) as ONE matmul against
    # the pre-concatenated (D, Ha+Hb) weight.
    x = x_ref[...].astype(w_ref.dtype)
    y = jnp.dot(x, w_ref[...], preferred_element_type=jnp.float32)
    o_ref[...] = (y + b_ref[...]).astype(o_ref.dtype)


def _hybrid_kernel(x_ref, w1_ref, b1_ref, w2_ref, b2_ref, r1_ref, r3_ref):
    # Fused chain; only r1 and r3 are stored (r2 = relu(r1) is recovered in
    # the wrapper -> one fewer full-tile store per step).
    x = x_ref[...].astype(w1_ref.dtype)
    h1 = jnp.dot(x, w1_ref[...],
                 preferred_element_type=jnp.float32) + b1_ref[...]
    r1_ref[...] = h1.astype(r1_ref.dtype)
    h2 = jnp.maximum(h1, 0.0)
    y = jnp.dot(h2.astype(w2_ref.dtype), w2_ref[...],
                preferred_element_type=jnp.float32)
    r3_ref[...] = (y + b2_ref[...]).astype(r3_ref.dtype)


# ---------------------------------------------------------------------------
# wrappers: pad x (no cast), grid over batch, slice padding back off.
# ---------------------------------------------------------------------------

def fused_vertical(x, p, *, batch_tile=None, out_dtype=None):
    B, D = x.shape
    assert D == p["D"]
    out_dtype = out_dtype or x.dtype
    Dp, Hp = p["Dp"], p["Hp"]
    TB, Bp = _batch_tiling(B, batch_tile or _DEFAULT_BATCH_TILE, _MIN_GRID)

    xp = _pad_axis(_pad_axis(x, 0, Bp), 1, Dp)          # f32 streamed; no cast

    resident = ((p["w1"].size + p["w2"].size) * _itemsize(p["w1"].dtype)
                + (p["b1"].size + p["b2"].size) * 4)
    streamed_in = TB * Dp * _itemsize(xp.dtype)
    streamed_out = TB * Dp * _itemsize(out_dtype)
    scratch = TB * Hp * 4
    flops = 4 * Bp * Dp * Hp
    bytes_acc = (xp.size * _itemsize(xp.dtype) + resident
                 + Bp * Dp * _itemsize(out_dtype))

    out = pl.pallas_call(
        _vertical_kernel,
        out_shape=jax.ShapeDtypeStruct((Bp, Dp), out_dtype),
        grid_spec=pltpu.PrefetchScalarGridSpec(
            num_scalar_prefetch=0,
            grid=(Bp // TB,),
            in_specs=[
                pl.BlockSpec((TB, Dp), lambda i: (i, 0)),   # x: streamed (f32)
                _resident_spec((Dp, Hp)),                   # W1
                _resident_spec((1, Hp)),                    # b1
                _resident_spec((Hp, Dp)),                   # W2
                _resident_spec((1, Dp)),                    # b2
            ],
            out_specs=pl.BlockSpec((TB, Dp), lambda i: (i, 0)),
        ),
        compiler_params=pltpu.CompilerParams(
            dimension_semantics=("parallel",),
            vmem_limit_bytes=_vmem_limit(resident, streamed_in, streamed_out,
                                         scratch)),
        cost_estimate=pl.CostEstimate(
            flops=int(flops), transcendentals=0, bytes_accessed=int(bytes_acc)),
    )(xp, p["w1"], p["b1"], p["w2"], p["b2"])
    return out[:B, :D]


def fused_horizontal(x, p, *, batch_tile=None, out_dtype=None):
    B, D = x.shape
    assert D == p["D"]
    out_dtype = out_dtype or x.dtype
    Dp, Hap, Hbp = p["Dp"], p["Hap"], p["Hbp"]
    Ha, Hb = p["Ha"], p["Hb"]
    Np = Hap + Hbp
    TB, Bp = _batch_tiling(B, batch_tile or _DEFAULT_BATCH_TILE, _MIN_GRID)

    xp = _pad_axis(_pad_axis(x, 0, Bp), 1, Dp)

    resident = p["w"].size * _itemsize(p["w"].dtype) + p["b"].size * 4
    streamed_in = TB * Dp * _itemsize(xp.dtype)
    streamed_out = TB * Np * _itemsize(out_dtype)
    flops = 2 * Bp * Dp * Np
    bytes_acc = (xp.size * _itemsize(xp.dtype) + resident
                 + Bp * Np * _itemsize(out_dtype))

    out = pl.pallas_call(
        _horizontal_kernel,
        out_shape=jax.ShapeDtypeStruct((Bp, Np), out_dtype),
        grid_spec=pltpu.PrefetchScalarGridSpec(
            num_scalar_prefetch=0,
            grid=(Bp // TB,),
            in_specs=[
                pl.BlockSpec((TB, Dp), lambda i: (i, 0)),   # x: streamed (f32)
                _resident_spec((Dp, Np)),                   # [Wa|Wb]
                _resident_spec((1, Np)),                    # [ba|bb]
            ],
            out_specs=pl.BlockSpec((TB, Np), lambda i: (i, 0)),
        ),
        compiler_params=pltpu.CompilerParams(
            dimension_semantics=("parallel",),
            vmem_limit_bytes=_vmem_limit(resident, streamed_in, streamed_out)),
        cost_estimate=pl.CostEstimate(
            flops=int(flops), transcendentals=0, bytes_accessed=int(bytes_acc)),
    )(xp, p["w"], p["b"])

    if Hap == Ha and Hbp == Hb:
        return out[:B, :Ha + Hb]
    # strip lane padding between the two branches (wrapper-side)
    return jnp.concatenate([out[:B, :Ha], out[:B, Hap:Hap + Hb]], axis=-1)


def fused_hybrid(x, p, *, batch_tile=None, out_dtype=None):
    B, D = x.shape
    assert D == p["D"]
    out_dtype = out_dtype or x.dtype
    Dp, Hp, H = p["Dp"], p["Hp"], p["H"]
    TB, Bp = _batch_tiling(B, batch_tile or _DEFAULT_BATCH_TILE, _MIN_GRID)

    xp = _pad_axis(_pad_axis(x, 0, Bp), 1, Dp)

    resident = ((p["w1"].size + p["w2"].size) * _itemsize(p["w1"].dtype)
                + (p["b1"].size + p["b2"].size) * 4)
    streamed_in = TB * Dp * _itemsize(xp.dtype)
    streamed_out = TB * (Hp + Dp) * _itemsize(out_dtype)
    scratch = TB * Hp * 4
    flops = 4 * Bp * Dp * Hp
    bytes_acc = (xp.size * _itemsize(xp.dtype) + resident
                 + Bp * (Hp + Dp) * _itemsize(out_dtype))

    r1, r3 = pl.pallas_call(
        _hybrid_kernel,
        out_shape=(
            jax.ShapeDtypeStruct((Bp, Hp), out_dtype),
            jax.ShapeDtypeStruct((Bp, Dp), out_dtype),
        ),
        grid_spec=pltpu.PrefetchScalarGridSpec(
            num_scalar_prefetch=0,
            grid=(Bp // TB,),
            in_specs=[
                pl.BlockSpec((TB, Dp), lambda i: (i, 0)),
                _resident_spec((Dp, Hp)),
                _resident_spec((1, Hp)),
                _resident_spec((Hp, Dp)),
                _resident_spec((1, Dp)),
            ],
            out_specs=(
                pl.BlockSpec((TB, Hp), lambda i: (i, 0)),
                pl.BlockSpec((TB, Dp), lambda i: (i, 0)),
            ),
        ),
        compiler_params=pltpu.CompilerParams(
            dimension_semantics=("parallel",),
            vmem_limit_bytes=_vmem_limit(resident, streamed_in, streamed_out,
                                         scratch)),
        cost_estimate=pl.CostEstimate(
            flops=int(flops), transcendentals=0, bytes_accessed=int(bytes_acc)),
    )(xp, p["w1"], p["b1"], p["w2"], p["b2"])

    r1c = r1[:B, :H]
    r2c = jnp.maximum(r1c, 0)            # ReLU intermediate recovered on host side
    final = r3[:B, :D]
    # PyTorch HYBRID returns (final_x, [op1(x), op2(.), op3(.)])
    return final, [r1c, r2c, final]


# ---------------------------------------------------------------------------
# main: deterministic params, run, verify against a pure-JAX reference that
# uses the same bf16-operand / f32-accumulate arithmetic.
# ---------------------------------------------------------------------------

if __name__ == "__main__":
    def run_case(B, D, H, key):
        ks = jax.random.split(key, 7)
        x = jax.random.normal(ks[0], (B, D), jnp.float32)
        w1 = jax.random.normal(ks[1], (D, H), jnp.float32) * 0.05
        b1 = jax.random.normal(ks[2], (H,), jnp.float32) * 0.05
        w2 = jax.random.normal(ks[3], (H, D), jnp.float32) * 0.05
        b2 = jax.random.normal(ks[4], (D,), jnp.float32) * 0.05
        wb = jax.random.normal(ks[5], (D, H), jnp.float32) * 0.05
        bb = jax.random.normal(ks[6], (H,), jnp.float32) * 0.05

        # one-time weight prep (pad + bf16 cast + horizontal concat)
        vparams = prepare_vertical_params(w1, b1, w2, b2)
        hparams = prepare_horizontal_params(w1, b1, wb, bb)

        cdt = jnp.bfloat16

        def lin(a, w, b):
            return jnp.dot(a.astype(cdt), w.astype(cdt),
                           preferred_element_type=jnp.float32) + b

        ref_r1 = lin(x, w1, b1)
        ref_r2 = jnp.maximum(ref_r1, 0.0)
        ref_r3 = lin(ref_r2, w2, b2)
        ref_hz = jnp.concatenate([lin(x, w1, b1), lin(x, wb, bb)], axis=-1)

        y_v = fused_vertical(x, vparams)
        y_h = fused_horizontal(x, hparams)
        y_f, inters = fused_hybrid(x, vparams)
        jax.block_until_ready((y_v, y_h, y_f, inters))

        tol = dict(atol=2e-3, rtol=2e-3)
        assert jnp.allclose(y_v, ref_r3, **tol)
        assert jnp.allclose(y_h, ref_hz, **tol)
        assert jnp.allclose(inters[0], ref_r1, **tol)
        assert jnp.allclose(inters[1], ref_r2, **tol)
        assert jnp.allclose(inters[2], ref_r3, **tol)
        assert jnp.allclose(y_f, ref_r3, **tol)

    key = jax.random.PRNGKey(0)
    k_aligned, k_small = jax.random.split(key)
    # lane/sublane-aligned shapes: multi-step batch grid, resident weights
    run_case(B=256, D=128, H=256, key=k_aligned)
    # small unaligned shapes (original module scale): exercises the
    # wrapper-side 128-lane padding path
    run_case(B=8, D=32, H=64, key=k_small)

    print("KERNEL_OK")
</pallas_src>

<mosaic_0001>
module attributes {stable_mosaic.version = 11 : i64} {
  func.func @_vertical_kernel(%arg0: i32, %arg1: memref<64x128xf32, #tpu.memory_space<vmem>>, %arg2: memref<128x256xbf16, #tpu.memory_space<vmem>>, %arg3: memref<1x256xf32, #tpu.memory_space<vmem>>, %arg4: memref<256x128xbf16, #tpu.memory_space<vmem>>, %arg5: memref<1x128xf32, #tpu.memory_space<vmem>>, %arg6: memref<64x128xf32, #tpu.memory_space<vmem>>) attributes {dimension_semantics = [#tpu.dimension_semantics<parallel>], iteration_bounds = array<i64: 4>, scalar_prefetch = 0 : i64, scratch_operands = 0 : i64, tpu.core_type = #tpu.core_type<tc>, window_params = [{transform_indices = @transform_0, window_bounds = array<i64: 64, 128>}, {pipeline_mode = #tpu.pipeline_mode<synchronous>, transform_indices = @transform_1, window_bounds = array<i64: 128, 256>}, {pipeline_mode = #tpu.pipeline_mode<synchronous>, transform_indices = @transform_2, window_bounds = array<i64: 1, 256>}, {pipeline_mode = #tpu.pipeline_mode<synchronous>, transform_indices = @transform_3, window_bounds = array<i64: 256, 128>}, {pipeline_mode = #tpu.pipeline_mode<synchronous>, transform_indices = @transform_4, window_bounds = array<i64: 1, 128>}, {transform_indices = @transform_5, window_bounds = array<i64: 64, 128>}]} {
    %c0 = arith.constant 0 : index
    %c0_0 = arith.constant 0 : index
    %0 = vector.load %arg1[%c0, %c0_0] : memref<64x128xf32, #tpu.memory_space<vmem>>, vector<64x128xf32>
    %1 = arith.truncf %0 : vector<64x128xf32> to vector<64x128xbf16>
    %c0_1 = arith.constant 0 : index
    %c0_2 = arith.constant 0 : index
    %2 = vector.load %arg2[%c0_1, %c0_2] : memref<128x256xbf16, #tpu.memory_space<vmem>>, vector<128x256xbf16>
    %cst = arith.constant dense<0.000000e+00> : vector<64x256xf32>
    %3 = tpu.matmul %1, %2, %cst {dimension_numbers = #tpu.dot_dimension_numbers<[1], [0], [0], [1], [0, 0, 1, 1], [], []>} : vector<64x128xbf16>, vector<128x256xbf16>, vector<64x256xf32> -> vector<64x256xf32>
    %c0_3 = arith.constant 0 : index
    %c0_4 = arith.constant 0 : index
    %4 = vector.load %arg3[%c0_3, %c0_4] : memref<1x256xf32, #tpu.memory_space<vmem>>, vector<1x256xf32>
    %5 = vector.broadcast %4 : vector<1x256xf32> to vector<64x256xf32>
    %6 = arith.addf %3, %5 : vector<64x256xf32>
    %cst_5 = arith.constant 0.000000e+00 : f32
    %7 = vector.broadcast %cst_5 : f32 to vector<64x256xf32>
    %8 = arith.maximumf %6, %7 : vector<64x256xf32>
    %9 = arith.truncf %8 : vector<64x256xf32> to vector<64x256xbf16>
    %c0_6 = arith.constant 0 : index
    %c0_7 = arith.constant 0 : index
    %10 = vector.load %arg4[%c0_6, %c0_7] : memref<256x128xbf16, #tpu.memory_space<vmem>>, vector<256x128xbf16>
    %cst_8 = arith.constant dense<0.000000e+00> : vector<64x128xf32>
    %11 = tpu.matmul %9, %10, %cst_8 {dimension_numbers = #tpu.dot_dimension_numbers<[1], [0], [0], [1], [0, 0, 1, 1], [], []>} : vector<64x256xbf16>, vector<256x128xbf16>, vector<64x128xf32> -> vector<64x128xf32>
    %c0_9 = arith.constant 0 : index
    %c0_10 = arith.constant 0 : index
    %12 = vector.load %arg5[%c0_9, %c0_10] : memref<1x128xf32, #tpu.memory_space<vmem>>, vector<1x128xf32>
    %13 = vector.broadcast %12 : vector<1x128xf32> to vector<64x128xf32>
    %14 = arith.addf %11, %13 : vector<64x128xf32>
    %c0_11 = arith.constant 0 : index
    %c0_12 = arith.constant 0 : index
    %15 = vector.load %arg6[%c0_11, %c0_12] : memref<64x128xf32, #tpu.memory_space<vmem>>, vector<64x128xf32>
    tpu.vector_store %arg6[%c0_11, %c0_12], %14 {strides = array<i32>} : memref<64x128xf32, #tpu.memory_space<vmem>>, vector<64x128xf32>,
    return
  }
  func.func @transform_0(%arg0: i32) -> (i32, i32) {
    %c0_i32 = arith.constant 0 : i32
    %c0_i32_0 = arith.constant 0 : i32
    return %arg0, %c0_i32 : i32, i32
  }
  func.func @transform_1(%arg0: i32) -> (i32, i32) {
    %c0_i32 = arith.constant 0 : i32
    %c0_i32_0 = arith.constant 0 : i32
    %c0_i32_1 = arith.constant 0 : i32
    return %c0_i32, %c0_i32_0 : i32, i32
  }
  func.func @transform_2(%arg0: i32) -> (i32, i32) {
    %c0_i32 = arith.constant 0 : i32
    %c0_i32_0 = arith.constant 0 : i32
    %c0_i32_1 = arith.constant 0 : i32
    return %c0_i32, %c0_i32_0 : i32, i32
  }
  func.func @transform_3(%arg0: i32) -> (i32, i32) {
    %c0_i32 = arith.constant 0 : i32
    %c0_i32_0 = arith.constant 0 : i32
    %c0_i32_1 = arith.constant 0 : i32
    return %c0_i32, %c0_i32_0 : i32, i32
  }
  func.func @transform_4(%arg0: i32) -> (i32, i32) {
    %c0_i32 = arith.constant 0 : i32
    %c0_i32_0 = arith.constant 0 : i32
    %c0_i32_1 = arith.constant 0 : i32
    return %c0_i32, %c0_i32_0 : i32, i32
  }
  func.func @transform_5(%arg0: i32) -> (i32, i32) {
    %c0_i32 = arith.constant 0 : i32
    %c0_i32_0 = arith.constant 0 : i32
    return %arg0, %c0_i32 : i32, i32
  }
}

</mosaic_0001>

<llo_original>
// kernel: tpu_custom_call.1
$region0: #{tpu_custom_call.1}
  #allocation0 [shape = 'u32[]', space=smem, size = 0x4, offset = 0x4, fixed_abs, tag = 'smem constant byte address 0x4 - core index']
  #allocation1 [shape = 'u32[144,128]{1,0:T(1,128)}', space=vmem, size = 0x12000, scoped, tag = 'internal scratch']
  %s0 = inlined_call_operand.hbm [shape: f32[256,128], index: 0, kind: input, shape index: {}]
  %s1 = inlined_call_operand.hbm [shape: bf16[128,256], index: 1, kind: input, shape index: {}]
  %s2 = inlined_call_operand.vmem [shape: f32[1,256], index: 2, kind: input, shape index: {}]
  %s3 = inlined_call_operand.hbm [shape: bf16[256,128], index: 3, kind: input, shape index: {}]
  %s4 = inlined_call_operand.vmem [shape: f32[1,128], index: 4, kind: input, shape index: {}]
  %s5 = inlined_call_operand.hbm [shape: f32[256,128], index: 5, kind: output, shape index: {}]
  %s6 = sld [smem:[#allocation0]]
  $region65: #{tpu_custom_call.1} parent=0
    _
  %s8 = ssub.s32 1, %s6
  %s9 = scalar_select 0, %s8, %s6
  $region1: #{tpu_custom_call.1} parent=0
    #allocation2 [shape = 'u8[65536]{0}', space=vmem, size = 0x10000, scoped, tag = 'input window, operand 0']
    #allocation3 [shape = 's32[2]{0}', space=sflag, size = 0x8, scoped, tag = 'scoped memory for tpu_custom_call.1']
    #allocation4 [shape = 's32[2]{0}', space=sflag, size = 0x8, scoped, tag = 'scoped memory for tpu_custom_call.1']
    #allocation5 [shape = 'u8[65536]{0}', space=vmem, size = 0x10000, scoped, tag = 'input window, operand 1, single buffered']
    #allocation6 [shape = 's32[1]{0}', space=sflag, size = 0x4, scoped, tag = 'scoped memory for tpu_custom_call.1']
    #allocation7 [shape = 'u8[65536]{0}', space=vmem, size = 0x10000, scoped, tag = 'input window, operand 3, single buffered']
    #allocation8 [shape = 'u8[65536]{0}', space=vmem, size = 0x10000, scoped, tag = 'output window, operand 0']
    %10 = vsyncpa [#allocation3], 0
    %s11 = scalar_lea.sflag [#allocation3], 1
    %12 = vsyncpa %s11, 0
    %13 = vsyncpa [#allocation6], 0
    %14 = vsyncpa [#allocation4], 0
    %s15 = scalar_lea.sflag [#allocation4], 1
    %16 = vsyncpa %s15, 0
    loop: start=0, step=1, limit=6
    $region2: #{tpu_custom_call.1} parent=1 // loop_pre_header
      _
    $region3: #{tpu_custom_call.1} parent=1 // loop_header
      %s18 = sphi 0, %s22
      %p19 = scmp.ge.s32.totalorder %s18, 6
      %s28 = sphi 0, %s30
      %s31 = sphi 0, %s28
      %s32 = sphi 0, %s31
      %s48 = sphi 0, %s32
      %s52 = sphi 0, %s52
      %s54 = sphi 0, %s52
      %s55 = sphi 0, %s54
      %s69 = sphi 0, %s55
      %s73 = sphi 0, %s73
      %s75 = sphi 0, %s73
      %s76 = sphi 0, %s75
      %s90 = sphi 0, %s76
      %s94 = sphi 0, %s94
      %s96 = sphi 0, %s94
      %s97 = sphi 0, %s96
      %s111 = sphi 0, %s97
      %s115 = sphi 0, %s115
      %s117 = sphi 0, %s115
      %s118 = sphi 0, %s117
      %s132 = sphi 0, %s118
      %s138 = sphi 0, %s140
      %s141 = sphi 0, %s138
      %s142 = sphi 0, %s141
      %s158 = sphi 0, %s142
    $region4: #{tpu_custom_call.1} parent=1 // loop_header_branch
      %21 = sbr.rel (%p19) target = $region8
    $region5: #{tpu_custom_call.1} parent=1 // loop_body
      %s23 = ssub.s32 %s18, 1
      %s24 = ssub.s32 %s18, 2
      %s25 = sadd.s32 %s18, 1
      %s26 = ssub.s32 %s18, %s25
      %p27 = scmp.eq.s32.totalorder %s26, 0
      %s29 = sadd.s32 %s28, 1
      %s30 = scalar_select %p27, %s28, %s29
      %p33 = pneg %p27
      %p34 = scmp.eq.s32.totalorder %s18, 3
      %p35 = por %p33, %p34
      %p36 = scmp.ne.s32.totalorder %s28, %s31
      %p37 = scmp.eq.s32.totalorder %s18, 0
      %p38 = por %p36, %p37
      %p39 = scmp.ne.s32.totalorder %s28, %s31
      %p40 = scmp.eq.s32.totalorder %s23, 3
      %p41 = por %p39, %p40
      %p42 = scmp.ne.s32.totalorder %s31, %s32
      %p43 = scmp.eq.s32.totalorder %s23, 0
      %p44 = por %p42, %p43
      %p45 = scmp.ne.s32.totalorder %s31, %s32
      %p46 = scmp.eq.s32.totalorder %s24, 3
      %p47 = por %p45, %p46
      %p49 = scmp.ne.s32.totalorder %s32, %s48
      %p50 = scmp.eq.s32.totalorder %s24, 0
      %p51 = por %p49, %p50
      %s53 = sadd.s32 %s52, 1
      %p56 = scmp.eq.s32.totalorder %s18, 3
      %p57 = scmp.ne.s32.totalorder %s52, %s54
      %p58 = scmp.eq.s32.totalorder %s18, 0
      %p59 = por %p57, %p58
      %p60 = scmp.ne.s32.totalorder %s52, %s54
      %p61 = scmp.eq.s32.totalorder %s23, 3
      %p62 = por %p60, %p61
      %p63 = scmp.ne.s32.totalorder %s54, %s55
      %p64 = scmp.eq.s32.totalorder %s23, 0
      %p65 = por %p63, %p64
      %p66 = scmp.ne.s32.totalorder %s54, %s55
      %p67 = scmp.eq.s32.totalorder %s24, 3
      %p68 = por %p66, %p67
      %p70 = scmp.ne.s32.totalorder %s55, %s69
      %p71 = scmp.eq.s32.totalorder %s24, 0
      %p72 = por %p70, %p71
      %s74 = sadd.s32 %s73, 1
      %p77 = scmp.eq.s32.totalorder %s18, 3
      %p78 = scmp.ne.s32.totalorder %s73, %s75
      %p79 = scmp.eq.s32.totalorder %s18, 0
      %p80 = por %p78, %p79
      %p81 = scmp.ne.s32.totalorder %s73, %s75
      %p82 = scmp.eq.s32.totalorder %s23, 3
      %p83 = por %p81, %p82
      %p84 = scmp.ne.s32.totalorder %s75, %s76
      %p85 = scmp.eq.s32.totalorder %s23, 0
      %p86 = por %p84, %p85
      %p87 = scmp.ne.s32.totalorder %s75, %s76
      %p88 = scmp.eq.s32.totalorder %s24, 3
      %p89 = por %p87, %p88
      %p91 = scmp.ne.s32.totalorder %s76, %s90
      %p92 = scmp.eq.s32.totalorder %s24, 0
      %p93 = por %p91, %p92
      %s95 = sadd.s32 %s94, 1
      %p98 = scmp.eq.s32.totalorder %s18, 3
      %p99 = scmp.ne.s32.totalorder %s94, %s96
      %p100 = scmp.eq.s32.totalorder %s18, 0
      %p101 = por %p99, %p100
      %p102 = scmp.ne.s32.totalorder %s94, %s96
      %p103 = scmp.eq.s32.totalorder %s23, 3
      %p104 = por %p102, %p103
      %p105 = scmp.ne.s32.totalorder %s96, %s97
      %p106 = scmp.eq.s32.totalorder %s23, 0
      %p107 = por %p105, %p106
      %p108 = scmp.ne.s32.totalorder %s96, %s97
      %p109 = scmp.eq.s32.totalorder %s24, 3
      %p110 = por %p108, %p109
      %p112 = scmp.ne.s32.totalorder %s97, %s111
      %p113 = scmp.eq.s32.totalorder %s24, 0
      %p114 = por %p112, %p113
      %s116 = sadd.s32 %s115, 1
      %p119 = scmp.eq.s32.totalorder %s18, 3
      %p120 = scmp.ne.s32.totalorder %s115, %s117
      %p121 = scmp.eq.s32.totalorder %s18, 0
      %p122 = por %p120, %p121
      %p123 = scmp.ne.s32.totalorder %s115, %s117
      %p124 = scmp.eq.s32.totalorder %s23, 3
      %p125 = por %p123, %p124
      %p126 = scmp.ne.s32.totalorder %s117, %s118
      %p127 = scmp.eq.s32.totalorder %s23, 0
      %p128 = por %p126, %p127
      %p129 = scmp.ne.s32.totalorder %s117, %s118
      %p130 = scmp.eq.s32.totalorder %s24, 3
      %p131 = por %p129, %p130
      %p133 = scmp.ne.s32.totalorder %s118, %s132
      %p134 = scmp.eq.s32.totalorder %s24, 0
      %p135 = por %p133, %p134
      %s136 = ssub.s32 %s18, %s25
      %p137 = scmp.eq.s32.totalorder %s136, 0
      %s139 = sadd.s32 %s138, 1
      %s140 = scalar_select %p137, %s138, %s139
      %p143 = pneg %p137
      %p144 = scmp.eq.s32.totalorder %s18, 3
      %p145 = por %p143, %p144
      %p146 = scmp.ne.s32.totalorder %s138, %s141
      %p147 = scmp.eq.s32.totalorder %s18, 0
      %p148 = por %p146, %p147
      %p149 = scmp.ne.s32.totalorder %s138, %s141
      %p150 = scmp.eq.s32.totalorder %s23, 3
      %p151 = por %p149, %p150
      %p152 = scmp.ne.s32.totalorder %s141, %s142
      %p153 = scmp.eq.s32.totalorder %s23, 0
      %p154 = por %p152, %p153
      %p155 = scmp.ne.s32.totalorder %s141, %s142
      %p156 = scmp.eq.s32.totalorder %s24, 3
      %p157 = por %p155, %p156
      %p159 = scmp.ne.s32.totalorder %s142, %s158
      %p160 = scmp.eq.s32.totalorder %s24, 0
      %p161 = por %p159, %p160
      %p162 = scmp.le.s32.totalorder 1, %s18
      %p163 = scmp.lt.s32.totalorder %s18, 5
      %p164 = pnand %p162, %p163
      %p165 = pneg %p164
      // Predicated region
      $region9: #{tpu_custom_call.1} parent=5 // pred_check
        _
      $region10: #{tpu_custom_call.1} parent=5 // pred_check_branch
        %167 = sbr.rel (%p164) target = $region12
      $region11: #{tpu_custom_call.1} parent=5 // pred_region
        %s168 = ssub.s32 %s18, 1
        // Predicated region
        $region13: #{tpu_custom_call.1} parent=11 // pred_check
          %p169 = pneg %p65
        $region14: #{tpu_custom_call.1} parent=11 // pred_check_branch
          %171 = sbr.rel (%p169) target = $region16
        $region15: #{tpu_custom_call.1} parent=11 // pred_region
          %s173 = ssub.s32 2048, 2048
          %174 = vsyncadd [#allocation6], %s173
          %s175 = sshll.u32 [#allocation5], 4
          %s176 = int_to_ptr.vmem [resolvable:$true] %s175
          %181 = dma.hbm_to_vmem [thread:$0]  %s1, 2048, %s176, [#allocation6], 128, 128, 8
        $region16: #{tpu_custom_call.1} parent=11 // pred_fallthru
          _
        // Predicated region
        $region17: #{tpu_custom_call.1} parent=11 // pred_check
          %p182 = pneg %p86
        $region18: #{tpu_custom_call.1} parent=11 // pred_check_branch
          %184 = sbr.rel (%p182) target = $region20
        $region19: #{tpu_custom_call.1} parent=11 // pred_region
          _
        $region20: #{tpu_custom_call.1} parent=11 // pred_fallthru
          _
        // Predicated region
        $region21: #{tpu_custom_call.1} parent=11 // pred_check
          %p185 = pneg %p107
        $region22: #{tpu_custom_call.1} parent=11 // pred_check_branch
          %187 = sbr.rel (%p185) target = $region24
        $region23: #{tpu_custom_call.1} parent=11 // pred_region
          %s189 = ssub.s32 2048, 2048
          %190 = vsyncadd [#allocation6], %s189
          %s191 = sshll.u32 [#allocation7], 4
          %s192 = int_to_ptr.vmem [resolvable:$true] %s191
          %197 = dma.hbm_to_vmem [thread:$0]  %s3, 2048, %s192, [#allocation6], 64, 64, 4
        $region24: #{tpu_custom_call.1} parent=11 // pred_fallthru
          _
        // Predicated region
        $region25: #{tpu_custom_call.1} parent=11 // pred_check
          %p198 = pneg %p128
        $region26: #{tpu_custom_call.1} parent=11 // pred_check_branch
          %200 = sbr.rel (%p198) target = $region28
        $region27: #{tpu_custom_call.1} parent=11 // pred_region
          _
        $region28: #{tpu_custom_call.1} parent=11 // pred_fallthru
          _
      $region12: #{tpu_custom_call.1} parent=5 // pred_fallthru
        _
      %p201 = scmp.lt.s32.totalorder %s18, 4
      // Predicated region
      $region29: #{tpu_custom_call.1} parent=5 // pred_check
        %p202 = pneg %p201
      $region30: #{tpu_custom_call.1} parent=5 // pred_check_branch
        %204 = sbr.rel (%p202) target = $region32
      $region31: #{tpu_custom_call.1} parent=5 // pred_region
        // Predicated region
        $region33: #{tpu_custom_call.1} parent=31 // pred_check
          %p205 = pneg %p38
        $region34: #{tpu_custom_call.1} parent=31 // pred_check_branch
          %207 = sbr.rel (%p205) target = $region36
        $region35: #{tpu_custom_call.1} parent=31 // pred_region
          %s208 = sand.u32 %s28, 1
          %s209 = scalar_lea.sflag [#allocation3], %s208
          %s210 = sand.u32 %s28, 1
          %s211 = smul.addr %s210, 64
          %s212 = scalar_lea.vmem [#allocation2], %s211
          %s213 = smul.u32 8, %s18
          %s215 = ssub.s32 1024, 1024
          %216 = vsyncadd %s209, %s215
          %s217 = smul.addr %s213, 128
          %s218 = scalar_lea.hbm %s0, %s217
          %s219 = sshll.u32 %s212, 4
          %s220 = int_to_ptr.vmem [resolvable:$true] %s219
          %225 = dma.hbm_to_vmem [thread:$0]  %s218, 1024, %s220, %s209, 128, 128, 8
        $region36: #{tpu_custom_call.1} parent=31 // pred_fallthru
          _
      $region32: #{tpu_custom_call.1} parent=5 // pred_fallthru
        _
      %p226 = scmp.le.s32.totalorder 1, %s18
      %p227 = scmp.lt.s32.totalorder %s18, 5
      %p228 = pnand %p226, %p227
      %p229 = pneg %p228
      // Predicated region
      $region37: #{tpu_custom_call.1} parent=5 // pred_check
        _
      $region38: #{tpu_custom_call.1} parent=5 // pred_check_branch
        %231 = sbr.rel (%p228) target = $region40
      $region39: #{tpu_custom_call.1} parent=5 // pred_region
        %s232 = ssub.s32 %s18, 1
        %s233 = sand.u32 %s31, 1
        %s234 = scalar_lea.sflag [#allocation3], %s233
        %s235 = sand.u32 %s31, 1
        %s236 = smul.addr %s235, 64
        %s237 = scalar_lea.vmem [#allocation2], %s236
        // Predicated region
        $region41: #{tpu_custom_call.1} parent=39 // pred_check
          %p238 = pneg %p44
        $region42: #{tpu_custom_call.1} parent=39 // pred_check_branch
          %240 = sbr.rel (%p238) target = $region44
        $region43: #{tpu_custom_call.1} parent=39 // pred_region
          %241 = dma.done %s234, 1024
        $region44: #{tpu_custom_call.1} parent=39 // pred_fallthru
          _
        // Predicated region
        $region45: #{tpu_custom_call.1} parent=39 // pred_check
          %p242 = pneg %p65
        $region46: #{tpu_custom_call.1} parent=39 // pred_check_branch
          %244 = sbr.rel (%p242) target = $region48
        $region47: #{tpu_custom_call.1} parent=39 // pred_region
          %245 = dma.done [#allocation6], 2048
        $region48: #{tpu_custom_call.1} parent=39 // pred_fallthru
          _
        // Predicated region
        $region49: #{tpu_custom_call.1} parent=39 // pred_check
          %p246 = pneg %p107
        $region50: #{tpu_custom_call.1} parent=39 // pred_check_branch
          %248 = sbr.rel (%p246) target = $region52
        $region51: #{tpu_custom_call.1} parent=39 // pred_region
          %249 = dma.done [#allocation6], 2048
        $region52: #{tpu_custom_call.1} parent=39 // pred_fallthru
          _
        %s250 = sand.u32 %s31, 1
        %s251 = scalar_lea.sflag [#allocation3], %s250
        %s252 = sand.u32 %s31, 1
        %s253 = smul.addr %s252, 64
        %s254 = scalar_lea.vmem [#allocation2], %s253
        %p255 = pneg %p44
        %p256 = pneg %p41
        %p257 = pneg %p65
        %p258 = pneg %p62
        %p259 = pneg %p86
        %p260 = pneg %p83
        %p261 = pneg %p107
        %p262 = pneg %p104
        %p263 = pneg %p128
        %p264 = pneg %p125
        %p265 = pneg %p154
        %p266 = pneg %p151
        %s267 = sand.u32 %s141, 1
        %s268 = scalar_lea.sflag [#allocation4], %s267
        %s269 = sand.u32 %s141, 1
        %s270 = smul.addr %s269, 64
        %s271 = scalar_lea.vmem [#allocation8], %s270
        %s272 = smul.u32 8, %s23
        %s273 = smul.u32 8, %s23
        %v275 = vld [vmem:[%s237] sm:$0xff]
        %v276 = vld [vmem:[%s237 + $0x8] sm:$0xff]
        %v277 = vld [vmem:[%s237 + $0x10] sm:$0xff]
        %v278 = vld [vmem:[%s237 + $0x18] sm:$0xff]
        %v279 = vld [vmem:[%s237 + $0x20] sm:$0xff]
        %v280 = vld [vmem:[%s237 + $0x28] sm:$0xff]
        %v281 = vld [vmem:[%s237 + $0x30] sm:$0xff]
        %v282 = vld [vmem:[%s237 + $0x38] sm:$0xff]
        %v283 = vpack.c.bf16 %v276, %v275
        %v284 = vpack.c.bf16 %v278, %v277
        %v285 = vpack.c.bf16 %v280, %v279
        %v286 = vpack.c.bf16 %v282, %v281
        %v287 = vld [vmem:[#allocation5] sm:$0xff]
        %v288 = vld [vmem:[#allocation5 + $0x8] sm:$0xff]
        %v289 = vld [vmem:[#allocation5 + $0x10] sm:$0xff]
        %v290 = vld [vmem:[#allocation5 + $0x18] sm:$0xff]
        %v291 = vld [vmem:[#allocation5 + $0x20] sm:$0xff]
        %v292 = vld [vmem:[#allocation5 + $0x28] sm:$0xff]
        %v293 = vld [vmem:[#allocation5 + $0x30] sm:$0xff]
        %v294 = vld [vmem:[#allocation5 + $0x38] sm:$0xff]
        %v295 = vld [vmem:[#allocation5 + $0x40] sm:$0xff]
        %v296 = vld [vmem:[#allocation5 + $0x48] sm:$0xff]
        %v297 = vld [vmem:[#allocation5 + $0x50] sm:$0xff]
        %v298 = vld [vmem:[#allocation5 + $0x58] sm:$0xff]
        %v299 = vld [vmem:[#allocation5 + $0x60] sm:$0xff]
        %v300 = vld [vmem:[#allocation5 + $0x68] sm:$0xff]
        %v301 = vld [vmem:[#allocation5 + $0x70] sm:$0xff]
        %v302 = vld [vmem:[#allocation5 + $0x78] sm:$0xff]
        %v303 = vld [vmem:[%s2] sm:$0x3]
        %v305 = vlaneseq
        %v306 = vshrl.u32 %v305, 7
        %v307 = vsub.s32 0, %v306
        %v308 = vrot.slane %v303, %v307
        %v309 = vlaneseq
        %v310 = vshrl.u32 %v309, 7
        %v311 = vsub.s32 1, %v310
        %v312 = vrot.slane %v303, %v311
        %v331 = vunpack.c.l.b16 %v287
        %v332 = vunpack.c.h.b16 %v287
        %v333 = vunpack.c.l.b16 %v288
        %v334 = vunpack.c.h.b16 %v288
        %v335 = vunpack.c.l.b16 %v289
        %v336 = vunpack.c.h.b16 %v289
        %v337 = vunpack.c.l.b16 %v290
        %v338 = vunpack.c.h.b16 %v290
        %v339 = vunpack.c.l.b16 %v291
        %v340 = vunpack.c.h.b16 %v291
        %v341 = vunpack.c.l.b16 %v292
        %v342 = vunpack.c.h.b16 %v292
        %v343 = vunpack.c.l.b16 %v293
        %v344 = vunpack.c.h.b16 %v293
        %v345 = vunpack.c.l.b16 %v294
        %v346 = vunpack.c.h.b16 %v294
        %v347 = vunpack.c.l.b16 %v295
        %v348 = vunpack.c.h.b16 %v295
        %v349 = vunpack.c.l.b16 %v296
        %v350 = vunpack.c.h.b16 %v296
        %v351 = vunpack.c.l.b16 %v297
        %v352 = vunpack.c.h.b16 %v297
        %v353 = vunpack.c.l.b16 %v298
        %v354 = vunpack.c.h.b16 %v298
        %v355 = vunpack.c.l.b16 %v299
        %v356 = vunpack.c.h.b16 %v299
        %v357 = vunpack.c.l.b16 %v300
        %v358 = vunpack.c.h.b16 %v300
        %v359 = vunpack.c.l.b16 %v301
        %v360 = vunpack.c.h.b16 %v301
        %v361 = vunpack.c.l.b16 %v302
        %v362 = vunpack.c.h.b16 %v302
        %v363 = vpack.c.b16 %v333, %v331
        %v364 = vpack.c.b16 %v334, %v332
        %v365 = vpack.c.b16 %v337, %v335
        %v366 = vpack.c.b16 %v338, %v336
        %v367 = vpack.c.b16 %v341, %v339
        %v368 = vpack.c.b16 %v342, %v340
        %v369 = vpack.c.b16 %v345, %v343
        %v370 = vpack.c.b16 %v346, %v344
        %v371 = vpack.c.b16 %v349, %v347
        %v372 = vpack.c.b16 %v350, %v348
        %v373 = vpack.c.b16 %v353, %v351
        %v374 = vpack.c.b16 %v354, %v352
        %v375 = vpack.c.b16 %v357, %v355
        %v376 = vpack.c.b16 %v358, %v356
        %v377 = vpack.c.b16 %v361, %v359
        %v378 = vpack.c.b16 %v362, %v360
        %395 = vmatprep.subr.bf16.mxu0 %v378
        %396 = vmatpush1.bf16.msra.mxu0 %v377
        %397 = vmatprep.subr.bf16.mxu0 %v376
        %398 = vmatpush1.bf16.msra.mxu0 %v375
        %399 = vmatprep.subr.bf16.mxu0 %v374
        %400 = vmatpush1.bf16.msra.mxu0 %v373
        %401 = vmatprep.subr.bf16.mxu0 %v372
        %402 = vmatpush1.bf16.msra.mxu0 %v371
        %403 = vmatprep.subr.bf16.mxu0 %v370
        %404 = vmatpush1.bf16.msra.mxu0 %v369
        %405 = vmatprep.subr.bf16.mxu0 %v368
        %406 = vmatpush1.bf16.msra.mxu0 %v367
        %407 = vmatprep.subr.bf16.mxu0 %v366
        %408 = vmatpush1.bf16.msra.mxu0 %v365
        %409 = vmatprep.subr.bf16.mxu0 %v364
        %410 = vmatpush1.bf16.msra.mxu0 %v363
        %411 = vmatprep.subr.bf16.mxu0 0
        %412 = vmatpush2.bf16.msra.mxu0 0
        %413 = vmatprep.subr.bf16.mxu0 0
        %414 = vmatpush2.bf16.msra.mxu0 0
        %415 = vmatprep.subr.bf16.mxu0 0
        %416 = vmatpush2.bf16.msra.mxu0 0
        %417 = vmatprep.subr.bf16.mxu0 0
        %418 = vmatpush2.bf16.msra.mxu0 0
        %419 = vmatprep.subr.bf16.mxu0 0
        %420 = vmatpush2.bf16.msra.mxu0 0
        %421 = vmatprep.subr.bf16.mxu0 0
        %422 = vmatpush2.bf16.msra.mxu0 0
        %423 = vmatprep.subr.bf16.mxu0 0
        %424 = vmatpush2.bf16.msra.mxu0 0
        %425 = vmatprep.subr.bf16.mxu0 0
        %426 = vmatpush2.bf16.msra.mxu0 0
        %427 = vmatprep.mubr.bf16.mxu0 0
        %428 = vmatmul.mubr.bf16.gmra.mxu0 %v283
        %v429 = vpop.f32.mrf.mxu0
        %v430 = vadd.f32 %v308, %v429
        %v431 = vpop.f32.mrf.mxu0
        %v432 = vadd.f32 %v312, %v431
        %v433 = vpop.f32.mrf.mxu0
        %v434 = vadd.f32 %v308, %v433
        %v435 = vpop.f32.mrf.mxu0
        %v436 = vadd.f32 %v312, %v435
        %437 = vmatprep.mubr.bf16.mxu0 0
        %438 = vmatmul.mubr.bf16.gmra.mxu0 %v284
        %v439 = vpop.f32.mrf.mxu0
        %v440 = vadd.f32 %v308, %v439
        %v441 = vpop.f32.mrf.mxu0
        %v442 = vadd.f32 %v312, %v441
        %v443 = vpop.f32.mrf.mxu0
        %v444 = vadd.f32 %v308, %v443
        %v445 = vpop.f32.mrf.mxu0
        %v446 = vadd.f32 %v312, %v445
        %447 = vmatprep.mubr.bf16.mxu0 0
        %448 = vmatmul.mubr.bf16.gmra.mxu0 %v285
        %v449 = vpop.f32.mrf.mxu0
        %v450 = vadd.f32 %v308, %v449
        %v451 = vpop.f32.mrf.mxu0
        %v452 = vadd.f32 %v312, %v451
        %v453 = vpop.f32.mrf.mxu0
        %v454 = vadd.f32 %v308, %v453
        %v455 = vpop.f32.mrf.mxu0
        %v456 = vadd.f32 %v312, %v455
        %457 = vmatprep.mubr.bf16.mxu0 0
        %458 = vmatmul.mubr.bf16.gmra.mxu0 %v286
        %v459 = vpop.f32.mrf.mxu0
        %v460 = vadd.f32 %v308, %v459
        %v461 = vpop.f32.mrf.mxu0
        %v462 = vadd.f32 %v312, %v461
        %v463 = vpop.f32.mrf.mxu0
        %v464 = vadd.f32 %v308, %v463
        %v465 = vpop.f32.mrf.mxu0
        %v466 = vadd.f32 %v312, %v465
        %467 = vdwg.mxu0
        %v468 = vmax.f32 %v430, 0.0
        %v469 = vmax.f32 %v432, 0.0
        %v470 = vmax.f32 %v434, 0.0
        %v471 = vmax.f32 %v436, 0.0
        %v472 = vmax.f32 %v440, 0.0
        %v473 = vmax.f32 %v442, 0.0
        %v474 = vmax.f32 %v444, 0.0
        %v475 = vmax.f32 %v446, 0.0
        %v476 = vmax.f32 %v450, 0.0
        %v477 = vmax.f32 %v452, 0.0
        %v478 = vmax.f32 %v454, 0.0
        %v479 = vmax.f32 %v456, 0.0
        %v480 = vmax.f32 %v460, 0.0
        %v481 = vmax.f32 %v462, 0.0
        %v482 = vmax.f32 %v464, 0.0
        %v483 = vmax.f32 %v466, 0.0
        %v484 = vpack.c.bf16 %v470, %v468
        %v485 = vpack.c.bf16 %v471, %v469
        %v486 = vpack.c.bf16 %v474, %v472
        %v487 = vpack.c.bf16 %v475, %v473
        %v488 = vpack.c.bf16 %v478, %v476
        %v489 = vpack.c.bf16 %v479, %v477
        %v490 = vpack.c.bf16 %v482, %v480
        %v491 = vpack.c.bf16 %v483, %v481
        %v492 = vld [vmem:[#allocation7] sm:$0xf]
        %v493 = vld [vmem:[#allocation7 + $0x4] sm:$0xf]
        %v494 = vld [vmem:[#allocation7 + $0x8] sm:$0xf]
        %v495 = vld [vmem:[#allocation7 + $0xc] sm:$0xf]
        %v496 = vld [vmem:[#allocation7 + $0x10] sm:$0xf]
        %v497 = vld [vmem:[#allocation7 + $0x14] sm:$0xf]
        %v498 = vld [vmem:[#allocation7 + $0x18] sm:$0xf]
        %v499 = vld [vmem:[#allocation7 + $0x1c] sm:$0xf]
        %v500 = vld [vmem:[#allocation7 + $0x20] sm:$0xf]
        %v501 = vld [vmem:[#allocation7 + $0x24] sm:$0xf]
        %v502 = vld [vmem:[#allocation7 + $0x28] sm:$0xf]
        %v503 = vld [vmem:[#allocation7 + $0x2c] sm:$0xf]
        %v504 = vld [vmem:[#allocation7 + $0x30] sm:$0xf]
        %v505 = vld [vmem:[#allocation7 + $0x34] sm:$0xf]
        %v506 = vld [vmem:[#allocation7 + $0x38] sm:$0xf]
        %v507 = vld [vmem:[#allocation7 + $0x3c] sm:$0xf]
        %v508 = vld [vmem:[#allocation7 + $0x40] sm:$0xf]
        %v509 = vld [vmem:[#allocation7 + $0x44] sm:$0xf]
        %v510 = vld [vmem:[#allocation7 + $0x48] sm:$0xf]
        %v511 = vld [vmem:[#allocation7 + $0x4c] sm:$0xf]
        %v512 = vld [vmem:[#allocation7 + $0x50] sm:$0xf]
        %v513 = vld [vmem:[#allocation7 + $0x54] sm:$0xf]
        %v514 = vld [vmem:[#allocation7 + $0x58] sm:$0xf]
        %v515 = vld [vmem:[#allocation7 + $0x5c] sm:$0xf]
        %v516 = vld [vmem:[#allocation7 + $0x60] sm:$0xf]
        %v517 = vld [vmem:[#allocation7 + $0x64] sm:$0xf]
        %v518 = vld [vmem:[#allocation7 + $0x68] sm:$0xf]
        %v519 = vld [vmem:[#allocation7 + $0x6c] sm:$0xf]
        %v520 = vld [vmem:[#allocation7 + $0x70] sm:$0xf]
        %v521 = vld [vmem:[#allocation7 + $0x74] sm:$0xf]
        %v522 = vld [vmem:[#allocation7 + $0x78] sm:$0xf]
        %v523 = vld [vmem:[#allocation7 + $0x7c] sm:$0xf]
        %v524 = vld [vmem:[%s4] sm:$0x1]
        %v526 = vlaneseq
        %v527 = vshrl.u32 %v526, 7
        %v528 = vsub.s32 0, %v527
        %v529 = vrot.slane %v524, %v528
        %v563 = vunpack.c.l.b16 %v492
        %v564 = vunpack.c.l.b16 %v493
        %v565 = vunpack.c.l.b16 %v494
        %v566 = vunpack.c.l.b16 %v495
        %v567 = vunpack.c.l.b16 %v496
        %v568 = vunpack.c.l.b16 %v497
        %v569 = vunpack.c.l.b16 %v498
        %v570 = vunpack.c.l.b16 %v499
        %v571 = vunpack.c.l.b16 %v500
        %v572 = vunpack.c.l.b16 %v501
        %v573 = vunpack.c.l.b16 %v502
        %v574 = vunpack.c.l.b16 %v503
        %v575 = vunpack.c.l.b16 %v504
        %v576 = vunpack.c.l.b16 %v505
        %v577 = vunpack.c.l.b16 %v506
        %v578 = vunpack.c.l.b16 %v507
        %v579 = vunpack.c.l.b16 %v508
        %v580 = vunpack.c.l.b16 %v509
        %v581 = vunpack.c.l.b16 %v510
        %v582 = vunpack.c.l.b16 %v511
        %v583 = vunpack.c.l.b16 %v512
        %v584 = vunpack.c.l.b16 %v513
        %v585 = vunpack.c.l.b16 %v514
        %v586 = vunpack.c.l.b16 %v515
        %v587 = vunpack.c.l.b16 %v516
        %v588 = vunpack.c.l.b16 %v517
        %v589 = vunpack.c.l.b16 %v518
        %v590 = vunpack.c.l.b16 %v519
        %v591 = vunpack.c.l.b16 %v520
        %v592 = vunpack.c.l.b16 %v521
        %v593 = vunpack.c.l.b16 %v522
        %v594 = vunpack.c.l.b16 %v523
        %v595 = vpack.c.b16 %v564, %v563
        %v596 = vpack.c.b16 %v566, %v565
        %v597 = vpack.c.b16 %v568, %v567
        %v598 = vpack.c.b16 %v570, %v569
        %v599 = vpack.c.b16 %v572, %v571
        %v600 = vpack.c.b16 %v574, %v573
        %v601 = vpack.c.b16 %v576, %v575
        %v602 = vpack.c.b16 %v578, %v577
        %v603 = vpack.c.b16 %v580, %v579
        %v604 = vpack.c.b16 %v582, %v581
        %v605 = vpack.c.b16 %v584, %v583
        %v606 = vpack.c.b16 %v586, %v585
        %v607 = vpack.c.b16 %v588, %v587
        %v608 = vpack.c.b16 %v590, %v589
        %v609 = vpack.c.b16 %v592, %v591
        %v610 = vpack.c.b16 %v594, %v593
        %627 = vmatprep.subr.bf16.mxu0 0
        %628 = vmatpush1.bf16.msra.mxu0 %v602
        %629 = vmatprep.subr.bf16.mxu0 0
        %630 = vmatpush1.bf16.msra.mxu0 %v601
        %631 = vmatprep.subr.bf16.mxu0 0
        %632 = vmatpush1.bf16.msra.mxu0 %v600
        %633 = vmatprep.subr.bf16.mxu0 0
        %634 = vmatpush1.bf16.msra.mxu0 %v599
        %635 = vmatprep.subr.bf16.mxu0 0
        %636 = vmatpush1.bf16.msra.mxu0 %v598
        %637 = vmatprep.subr.bf16.mxu0 0
        %638 = vmatpush1.bf16.msra.mxu0 %v597
        %639 = vmatprep.subr.bf16.mxu0 0
        %640 = vmatpush1.bf16.msra.mxu0 %v596
        %641 = vmatprep.subr.bf16.mxu0 0
        %642 = vmatpush1.bf16.msra.mxu0 %v595
        %643 = vmatprep.subr.bf16.mxu0 0
        %644 = vmatpush2.bf16.msra.mxu0 %v610
        %645 = vmatprep.subr.bf16.mxu0 0
        %646 = vmatpush2.bf16.msra.mxu0 %v609
        %647 = vmatprep.subr.bf16.mxu0 0
        %648 = vmatpush2.bf16.msra.mxu0 %v608
        %649 = vmatprep.subr.bf16.mxu0 0
        %650 = vmatpush2.bf16.msra.mxu0 %v607
        %651 = vmatprep.subr.bf16.mxu0 0
        %652 = vmatpush2.bf16.msra.mxu0 %v606
        %653 = vmatprep.subr.bf16.mxu0 0
        %654 = vmatpush2.bf16.msra.mxu0 %v605
        %655 = vmatprep.subr.bf16.mxu0 0
        %656 = vmatpush2.bf16.msra.mxu0 %v604
        %657 = vmatprep.subr.bf16.mxu0 0
        %658 = vmatpush2.bf16.msra.mxu0 %v603
        %659 = vmatprep.mubr.bf16.mxu0 %v485
        %660 = vmatmul.mubr.bf16.gmra.mxu0 %v484
        %v661 = vpop.f32.mrf.mxu0
        %v662 = vadd.f32 %v529, %v661
        %v663 = vpop.f32.mrf.mxu0
        %v664 = vpop.f32.mrf.mxu0
        %v665 = vadd.f32 %v529, %v664
        %v666 = vpop.f32.mrf.mxu0
        %667 = vmatprep.mubr.bf16.mxu0 %v487
        %668 = vmatmul.mubr.bf16.gmra.mxu0 %v486
        %v669 = vpop.f32.mrf.mxu0
        %v670 = vadd.f32 %v529, %v669
        %v671 = vpop.f32.mrf.mxu0
        %v672 = vpop.f32.mrf.mxu0
        %v673 = vadd.f32 %v529, %v672
        %v674 = vpop.f32.mrf.mxu0
        %675 = vmatprep.mubr.bf16.mxu0 %v489
        %676 = vmatmul.mubr.bf16.gmra.mxu0 %v488
        %v677 = vpop.f32.mrf.mxu0
        %v678 = vadd.f32 %v529, %v677
        %v679 = vpop.f32.mrf.mxu0
        %v680 = vpop.f32.mrf.mxu0
        %v681 = vadd.f32 %v529, %v680
        %v682 = vpop.f32.mrf.mxu0
        %683 = vmatprep.mubr.bf16.mxu0 %v491
        %684 = vmatmul.mubr.bf16.gmra.mxu0 %v490
        %v685 = vpop.f32.mrf.mxu0
        %v686 = vadd.f32 %v529, %v685
        %v687 = vpop.f32.mrf.mxu0
        %v688 = vpop.f32.mrf.mxu0
        %v689 = vadd.f32 %v529, %v688
        %v690 = vpop.f32.mrf.mxu0
        %691 = vdwg.mxu0
        %692 = vst [vmem:[%s271] sm:$0xff] %v662
        %693 = vst [vmem:[%s271 + $0x8] sm:$0xff] %v665
        %694 = vst [vmem:[%s271 + $0x10] sm:$0xff] %v670
        %695 = vst [vmem:[%s271 + $0x18] sm:$0xff] %v673
        %696 = vst [vmem:[%s271 + $0x20] sm:$0xff] %v678
        %697 = vst [vmem:[%s271 + $0x28] sm:$0xff] %v681
        %698 = vst [vmem:[%s271 + $0x30] sm:$0xff] %v686
        %699 = vst [vmem:[%s271 + $0x38] sm:$0xff] %v689
        %s700 = sand.u32 %s141, 1
        %s701 = scalar_lea.sflag [#allocation4], %s700
        %s702 = sand.u32 %s141, 1
        %s703 = smul.addr %s702, 64
        %s704 = scalar_lea.vmem [#allocation8], %s703
        // Predicated region
        $region53: #{tpu_custom_call.1} parent=39 // pred_check
          %p705 = pneg %p151
        $region54: #{tpu_custom_call.1} parent=39 // pred_check_branch
          %707 = sbr.rel (%p705) target = $region56
        $region55: #{tpu_custom_call.1} parent=39 // pred_region
          %s708 = smul.u32 8, %s23
          %s710 = ssub.s32 1024, 1024
          %711 = vsyncadd %s701, %s710
          %s712 = smul.addr %s708, 128
          %s713 = scalar_lea.hbm %s5, %s712
          %s714 = sshll.u32 %s704, 4
          %s715 = int_to_ptr.vmem [resolvable:$true] %s714
          %720 = dma.vmem_to_hbm [thread:$0]  %s715, 1024, %s713, %s701, 128, 128, 8
        $region56: #{tpu_custom_call.1} parent=39 // pred_fallthru
          _
      $region40: #{tpu_custom_call.1} parent=5 // pred_fallthru
        _
      %p721 = scmp.le.s32.totalorder 2, %s18
      // Predicated region
      $region57: #{tpu_custom_call.1} parent=5 // pred_check
        %p722 = pneg %p721
      $region58: #{tpu_custom_call.1} parent=5 // pred_check_branch
        %724 = sbr.rel (%p722) target = $region60
      $region59: #{tpu_custom_call.1} parent=5 // pred_region
        %s725 = ssub.s32 %s18, 2
        // Predicated region
        $region61: #{tpu_custom_call.1} parent=59 // pred_check
          %p726 = pneg %p157
        $region62: #{tpu_custom_call.1} parent=59 // pred_check_branch
          %728 = sbr.rel (%p726) target = $region64
        $region63: #{tpu_custom_call.1} parent=59 // pred_region
          %s729 = sand.u32 %s142, 1
          %s730 = scalar_lea.sflag [#allocation4], %s729
          %s731 = sand.u32 %s142, 1
          %s732 = smul.addr %s731, 64
          %s733 = scalar_lea.vmem [#allocation8], %s732
          %734 = dma.done %s730, 1024
        $region64: #{tpu_custom_call.1} parent=59 // pred_fallthru
          _
      $region60: #{tpu_custom_call.1} parent=5 // pred_fallthru
        _
    $region6: #{tpu_custom_call.1} parent=1 // loop_footer
      %s22 = sadd.s32 1, %s18
    $region7: #{tpu_custom_call.1} parent=1 // loop_footer_branch
      %17 = sbr.rel target = $region3
    $region8: #{tpu_custom_call.1} parent=1 // loop_exit
      _
    %735 = vsyncpa [#allocation3], 1
    %s736 = scalar_lea.sflag [#allocation3], 1
    %737 = vsyncpa %s736, 1
    %738 = vsyncpa [#allocation6], 1
    %739 = vsyncpa [#allocation4], 1
    %s740 = scalar_lea.sflag [#allocation4], 1
    %741 = vsyncpa %s740, 1

</llo_original>
